<compile_context>
chip_gen: v5e
topology: v5e:2x2
jax: 0.10.0
libtpu: 0.0.40
codegen_flags: <defaults>
</compile_context>

<pallas_src>
import jax
import jax.numpy as jnp
from jax.experimental import pallas as pl
from jax.experimental.pallas import tpu as pltpu


def _cloud_addition_kernel(cloudy_ref, pred_ref, out_ref):
    # out = cloudy + (tanh(pred) * 0.5 + 0.5)
    pred = jnp.tanh(pred_ref[...])
    out_ref[...] = cloudy_ref[...] + (pred * 0.5 + 0.5)


_LANES = 128
# Per-operand byte threshold for the grid-less single-block path.  3 operands
# at 2 MiB each (6 MiB resident) fit scoped VMEM on every TPU generation.
_SMALL_BYTES = 2 * 1024 * 1024
# Tiled-path per-operand tile bytes: conservative (v5e-safe) vs big (v6e/v7x).
_SAFE_TILE_BYTES = 2 * 1024 * 1024   # 3 ops x 2 bufs = 12 MiB < v5e 16 MiB default
_BIG_TILE_BYTES = 4 * 1024 * 1024    # 3 ops x 2 bufs = 24 MiB < v6e/v7x 32 MiB default
_BIG_VMEM_LIMIT = 32 * 1024 * 1024   # explicit scoped limit when using big tiles


def _pick_tile(rows, itemsize):
    """Generation-aware tile-row selection for the tiled (large) path."""
    target = _SAFE_TILE_BYTES
    vmem_limit = None
    try:
        cap = pltpu.get_tpu_info().vmem_capacity_bytes
        if cap >= 64 * 1024 * 1024:   # v6e (128 MiB) / v7x (64 MiB per TC)
            target = _BIG_TILE_BYTES
            vmem_limit = _BIG_VMEM_LIMIT
    except Exception:
        pass  # unknown part: keep the conservative v5e-safe tiling
    tile = min(rows, max(32, target // (_LANES * itemsize)))
    if tile != rows:
        # Round down to a 32-row multiple (dtype-safe sublane packing).
        tile -= tile % 32
    return tile, vmem_limit


def cloud_addition(cloudy_input, cloud_pred):
    """Pallas implementation of CloudAddition (activation=tanh, squash=True)."""
    assert cloudy_input.shape == cloud_pred.shape
    assert cloudy_input.dtype == cloud_pred.dtype
    orig_shape = cloudy_input.shape
    dtype = cloudy_input.dtype
    itemsize = jnp.dtype(dtype).itemsize
    total = cloudy_input.size

    # Lane-dense folding: flatten to (rows, 128).  If the element count is not
    # a multiple of 128, pad the flat view so every row uses all 128 lanes.
    pad = (-total) % _LANES
    x = cloudy_input.reshape(-1)
    p = cloud_pred.reshape(-1)
    if pad:
        x = jnp.pad(x, (0, pad))
        p = jnp.pad(p, (0, pad))
    rows = (total + pad) // _LANES
    x2 = x.reshape(rows, _LANES)
    p2 = p.reshape(rows, _LANES)

    nbytes = rows * _LANES * itemsize
    cost = pl.CostEstimate(
        flops=3 * total,            # mul + add + add per element
        transcendentals=total,      # tanh per element
        bytes_accessed=3 * nbytes,  # 2 reads + 1 write
    )

    if nbytes <= _SMALL_BYTES:
        # ---- Small path: single full-array block, no grid, no per-step cost ----
        out2 = pl.pallas_call(
            _cloud_addition_kernel,
            out_shape=jax.ShapeDtypeStruct((rows, _LANES), dtype),
            cost_estimate=cost,
        )(x2, p2)
    else:
        # ---- Large path: big generation-aware tiles, ragged last block masked ----
        tile, vmem_limit = _pick_tile(rows, itemsize)
        spec = pl.BlockSpec((tile, _LANES), lambda i: (i, 0))
        # TODO(synk): confirm on a v7x trace that "parallel" shards this 1-D
        # grid across both TensorCores; if not, switch to pltpu.CORE_PARALLEL.
        compiler_params = pltpu.CompilerParams(
            dimension_semantics=("parallel",),
            vmem_limit_bytes=vmem_limit,
        )
        out2 = pl.pallas_call(
            _cloud_addition_kernel,
            out_shape=jax.ShapeDtypeStruct((rows, _LANES), dtype),
            grid=(pl.cdiv(rows, tile),),
            in_specs=[spec, spec],
            out_specs=spec,
            compiler_params=compiler_params,
            cost_estimate=cost,
        )(x2, p2)

    out = out2.reshape(-1)
    if pad:
        out = out[:total]
    return out.reshape(orig_shape)


def cloud_addition_ref(cloudy_input, cloud_pred):
    pred = jnp.tanh(cloud_pred)
    pred = pred * 0.5 + 0.5
    return cloudy_input + pred


if __name__ == "__main__":
    key = jax.random.PRNGKey(0)
    k1, k2, k3, k4, k5, k6 = jax.random.split(key, 6)

    # Small NCHW input (single-block path): batch=2, channels=4, spatial=16.
    cloudy_small = jax.random.normal(k1, (2, 4, 16, 16), dtype=jnp.float32)
    pred_small = jax.random.normal(k2, (2, 4, 16, 16), dtype=jnp.float32)
    out_small = jax.block_until_ready(cloud_addition(cloudy_small, pred_small))
    ref_small = cloud_addition_ref(cloudy_small, pred_small)
    assert out_small.shape == cloudy_small.shape
    assert out_small.dtype == cloudy_small.dtype
    assert jnp.allclose(out_small, ref_small, atol=1e-5, rtol=1e-5)

    # Odd spatial dims (element count NOT divisible by 128): padded fallback.
    cloudy_odd = jax.random.normal(k3, (2, 3, 15, 15), dtype=jnp.float32)
    pred_odd = jax.random.normal(k4, (2, 3, 15, 15), dtype=jnp.float32)
    out_odd = jax.block_until_ready(cloud_addition(cloudy_odd, pred_odd))
    ref_odd = cloud_addition_ref(cloudy_odd, pred_odd)
    assert out_odd.shape == cloudy_odd.shape
    assert jnp.allclose(out_odd, ref_odd, atol=1e-5, rtol=1e-5)

    # Medium input (tiled large path; ragged last block on v5e-style tiling).
    cloudy_big = jax.random.normal(k5, (4, 8, 128, 160), dtype=jnp.float32)
    pred_big = jax.random.normal(k6, (4, 8, 128, 160), dtype=jnp.float32)
    out_big = jax.block_until_ready(cloud_addition(cloudy_big, pred_big))
    ref_big = cloud_addition_ref(cloudy_big, pred_big)
    assert out_big.shape == cloudy_big.shape
    assert out_big.dtype == cloudy_big.dtype
    assert jnp.allclose(out_big, ref_big, atol=1e-5, rtol=1e-5)

    print("KERNEL_OK")
</pallas_src>

<mosaic_0001>
module attributes {stable_mosaic.version = 11 : i64} {
  func.func @_cloud_addition_kernel(%arg0: memref<16x128xf32, #tpu.memory_space<vmem>>, %arg1: memref<16x128xf32, #tpu.memory_space<vmem>>, %arg2: memref<16x128xf32, #tpu.memory_space<vmem>>) attributes {dimension_semantics = [], scalar_prefetch = 0 : i64, scratch_operands = 0 : i64, tpu.core_type = #tpu.core_type<tc>} {
    %c0 = arith.constant 0 : index
    %c0_0 = arith.constant 0 : index
    %0 = vector.load %arg1[%c0, %c0_0] : memref<16x128xf32, #tpu.memory_space<vmem>>, vector<16x128xf32>
    %1 = math.tanh %0 : vector<16x128xf32>
    %c0_1 = arith.constant 0 : index
    %c0_2 = arith.constant 0 : index
    %2 = vector.load %arg0[%c0_1, %c0_2] : memref<16x128xf32, #tpu.memory_space<vmem>>, vector<16x128xf32>
    %cst = arith.constant 5.000000e-01 : f32
    %3 = vector.broadcast %cst : f32 to vector<16x128xf32>
    %4 = arith.mulf %1, %3 : vector<16x128xf32>
    %cst_3 = arith.constant 5.000000e-01 : f32
    %5 = vector.broadcast %cst_3 : f32 to vector<16x128xf32>
    %6 = arith.addf %4, %5 : vector<16x128xf32>
    %7 = arith.addf %2, %6 : vector<16x128xf32>
    %c0_4 = arith.constant 0 : index
    %c0_5 = arith.constant 0 : index
    %8 = vector.load %arg2[%c0_4, %c0_5] : memref<16x128xf32, #tpu.memory_space<vmem>>, vector<16x128xf32>
    tpu.vector_store %arg2[%c0_4, %c0_5], %7 {strides = array<i32>} : memref<16x128xf32, #tpu.memory_space<vmem>>, vector<16x128xf32>,
    return
  }
}

</mosaic_0001>

<llo_original>
// kernel: tpu_custom_call.1
$region0: #{tpu_custom_call.1}
  #allocation0 [shape = 'u32[]', space=smem, size = 0x4, offset = 0x4, fixed_abs, tag = 'smem constant byte address 0x4 - core index']
  #allocation1 [shape = 'u32[72,128]{1,0:T(1,128)}', space=vmem, size = 0x9000, scoped, tag = 'internal scratch']
  %s0 = inlined_call_operand.hbm [shape: f32[16,128], index: 0, kind: input, shape index: {}]
  %s1 = inlined_call_operand.hbm [shape: f32[16,128], index: 1, kind: input, shape index: {}]
  %s2 = inlined_call_operand.hbm [shape: f32[16,128], index: 2, kind: output, shape index: {}]
  %s3 = sld [smem:[#allocation0]]
  $region26: #{tpu_custom_call.1} parent=0
    _
  %s5 = ssub.s32 1, %s3
  %s6 = scalar_select 0, %s5, %s3
  $region1: #{tpu_custom_call.1} parent=0
    #allocation2 [shape = 'u8[8192]{0}', space=vmem, size = 0x2000, scoped, tag = 'input window, operand 0, single buffered']
    #allocation3 [shape = 's32[1]{0}', space=sflag, size = 0x4, scoped, tag = 'scoped memory for tpu_custom_call.1']
    #allocation4 [shape = 's32[1]{0}', space=sflag, size = 0x4, scoped, tag = 'scoped memory for tpu_custom_call.1']
    #allocation5 [shape = 'u8[8192]{0}', space=vmem, size = 0x2000, scoped, tag = 'input window, operand 1, single buffered']
    #allocation6 [shape = 's32[1]{0}', space=sflag, size = 0x4, scoped, tag = 'scoped memory for tpu_custom_call.1']
    #allocation7 [shape = 'u8[8192]{0}', space=vmem, size = 0x2000, scoped, tag = 'output window, operand 0, single buffered']
    %7 = vsyncpa [#allocation3], 0
    %8 = vsyncpa [#allocation6], 0
    %9 = vsyncpa [#allocation4], 0
    // Predicated region
    $region2: #{tpu_custom_call.1} parent=1 // pred_check
      _
    $region3: #{tpu_custom_call.1} parent=1 // pred_check_branch
      %11 = sbr.rel (0) target = $region5
    $region4: #{tpu_custom_call.1} parent=1 // pred_region
      %13 = vsyncadd [#allocation3], 0
      %s14 = sshll.u32 %s0, 4
      %s15 = int_to_ptr.hbm [resolvable:$true] %s14
      %s16 = sshll.u32 [#allocation2], 4
      %s17 = int_to_ptr.vmem [resolvable:$true] %s16
      %22 = dma.hbm_to_vmem [thread:$0]  %s15, 256, %s17, [#allocation3], 128, 128, 8
    $region5: #{tpu_custom_call.1} parent=1 // pred_fallthru
      _
    // Predicated region
    $region6: #{tpu_custom_call.1} parent=1 // pred_check
      _
    $region7: #{tpu_custom_call.1} parent=1 // pred_check_branch
      %24 = sbr.rel (0) target = $region9
    $region8: #{tpu_custom_call.1} parent=1 // pred_region
      %26 = vsyncadd [#allocation6], 0
      %s27 = sshll.u32 %s1, 4
      %s28 = int_to_ptr.hbm [resolvable:$true] %s27
      %s29 = sshll.u32 [#allocation5], 4
      %s30 = int_to_ptr.vmem [resolvable:$true] %s29
      %35 = dma.hbm_to_vmem [thread:$0]  %s28, 256, %s30, [#allocation6], 128, 128, 8
    $region9: #{tpu_custom_call.1} parent=1 // pred_fallthru
      _
    // Predicated region
    $region10: #{tpu_custom_call.1} parent=1 // pred_check
      _
    $region11: #{tpu_custom_call.1} parent=1 // pred_check_branch
      %37 = sbr.rel (0) target = $region13
    $region12: #{tpu_custom_call.1} parent=1 // pred_region
      %39 = dma.done [#allocation3], 256
    $region13: #{tpu_custom_call.1} parent=1 // pred_fallthru
      _
    // Predicated region
    $region14: #{tpu_custom_call.1} parent=1 // pred_check
      _
    $region15: #{tpu_custom_call.1} parent=1 // pred_check_branch
      %41 = sbr.rel (0) target = $region17
    $region16: #{tpu_custom_call.1} parent=1 // pred_region
      %43 = dma.done [#allocation6], 256
    $region17: #{tpu_custom_call.1} parent=1 // pred_fallthru
      _
    %v44 = vld [vmem:[#allocation5] sm:$0xff]
    %v45 = vld [vmem:[#allocation5 + $0x8] sm:$0xff]
    %v46 = vtanh.pop %v44
    %v47 = vtanh.pop %v45
    %v48 = vld [vmem:[#allocation2] sm:$0xff]
    %v49 = vld [vmem:[#allocation2 + $0x8] sm:$0xff]
    %v50 = vmul.f32 %v46, 0.5
    %v51 = vmul.f32 %v47, 0.5
    %v52 = vadd.f32 %v50, 0.5
    %v53 = vadd.f32 %v51, 0.5
    %v54 = vadd.f32 %v48, %v52
    %v55 = vadd.f32 %v49, %v53
    %56 = vst [vmem:[#allocation7] sm:$0xff] %v54
    %57 = vst [vmem:[#allocation7 + $0x8] sm:$0xff] %v55
    // Predicated region
    $region18: #{tpu_custom_call.1} parent=1 // pred_check
      _
    $region19: #{tpu_custom_call.1} parent=1 // pred_check_branch
      %59 = sbr.rel (0) target = $region21
    $region20: #{tpu_custom_call.1} parent=1 // pred_region
      %61 = vsyncadd [#allocation4], 0
      %s62 = sshll.u32 [#allocation7], 4
      %s63 = int_to_ptr.vmem [resolvable:$true] %s62
      %s64 = sshll.u32 %s2, 4
      %s65 = int_to_ptr.hbm [resolvable:$true] %s64
      %70 = dma.vmem_to_hbm [thread:$0]  %s63, 256, %s65, [#allocation4], 128, 128, 8
    $region21: #{tpu_custom_call.1} parent=1 // pred_fallthru
      _
    // Predicated region
    $region22: #{tpu_custom_call.1} parent=1 // pred_check
      _
    $region23: #{tpu_custom_call.1} parent=1 // pred_check_branch
      %72 = sbr.rel (0) target = $region25
    $region24: #{tpu_custom_call.1} parent=1 // pred_region
      %74 = dma.done [#allocation4], 256
    $region25: #{tpu_custom_call.1} parent=1 // pred_fallthru
      _
    %75 = vsyncpa [#allocation3], 1
    %76 = vsyncpa [#allocation6], 1
    %77 = vsyncpa [#allocation4], 1

</llo_original>
